<compile_context>
chip_gen: v5e
topology: v5e:2x2
jax: 0.10.0
libtpu: 0.0.40
codegen_flags: <defaults>
</compile_context>

<pallas_src>
import functools
import math

import jax
import jax.numpy as jnp
from jax.experimental import pallas as pl
from jax.experimental.pallas import tpu as pltpu


# ----------------------------------------------------------------------------
# Tile selection: largest tile <= cap that is a multiple of `unit` and divides
# dim; falls back to the full dim (always a legal block) if none exists.
# Caps are sized for the smallest scoped-VMEM budget (v6e/v7x: 32 MiB default).
# ----------------------------------------------------------------------------
def _pick_tile(dim, cap, unit):
    if dim <= cap:
        return dim
    t = (cap // unit) * unit
    while t >= unit:
        if dim % t == 0:
            return t
        t -= unit
    return dim


def _sublane_unit(dtype):
    """Minimal sublane multiple for a packed dtype (8 for 32-bit, 16 for 16-bit...)."""
    itemsize = jnp.dtype(dtype).itemsize
    return max(8, 32 // max(itemsize, 1))


# ----------------------------------------------------------------------------
# Pallas kernel 1: tiled identity copy (IdentityMatrixOperator.forward).
# ----------------------------------------------------------------------------
def _copy_kernel(x_ref, y_ref):
    y_ref[...] = x_ref[...]


@functools.partial(jax.jit, static_argnames=("tm", "tn"))
def _identity_copy(x, *, tm, tn):
    M, N = x.shape
    grid = (M // tm, N // tn)
    return pl.pallas_call(
        _copy_kernel,
        out_shape=jax.ShapeDtypeStruct((M, N), x.dtype),
        grid_spec=pltpu.PrefetchScalarGridSpec(
            num_scalar_prefetch=0,
            grid=grid,
            in_specs=[pl.BlockSpec((tm, tn), lambda i, j: (i, j))],
            out_specs=pl.BlockSpec((tm, tn), lambda i, j: (i, j)),
        ),
        compiler_params=pltpu.CompilerParams(
            dimension_semantics=("parallel", "parallel")),
        cost_estimate=pl.CostEstimate(
            flops=0,
            transcendentals=0,
            bytes_accessed=int(2 * M * N * jnp.dtype(x.dtype).itemsize)),
    )(x)


# ----------------------------------------------------------------------------
# Pallas kernel 2: fused complex matmul as a single real matmul on the MXU.
# Grid (M/tm, N/tn, K/tk), K innermost, f32 accumulator scratch, parallel
# semantics on the independent axes (megacore split on v7x).
# ----------------------------------------------------------------------------
def _fused_matmul_kernel(x_ref, w_ref, y_ref, acc_ref):
    @pl.when(pl.program_id(2) == 0)
    def _init():
        acc_ref[...] = jnp.zeros_like(acc_ref)

    acc_ref[...] += jnp.dot(x_ref[...], w_ref[...],
                            preferred_element_type=jnp.float32)

    @pl.when(pl.program_id(2) == pl.num_programs(2) - 1)
    def _store():
        y_ref[...] = acc_ref[...].astype(y_ref.dtype)


@functools.partial(jax.jit, static_argnames=("tm", "tn", "tk"))
def _fused_matmul(x, w, *, tm, tn, tk):
    """x: (M, 2K) real/imag-interleaved, w: (2K, 2N) fused weight -> (M, 2N)."""
    M, K2 = x.shape
    _, N2 = w.shape
    grid = (M // tm, N2 // tn, K2 // tk)
    return pl.pallas_call(
        _fused_matmul_kernel,
        out_shape=jax.ShapeDtypeStruct((M, N2), jnp.float32),
        grid_spec=pltpu.PrefetchScalarGridSpec(
            num_scalar_prefetch=0,
            grid=grid,
            in_specs=[pl.BlockSpec((tm, tk), lambda i, j, k: (i, k)),
                      pl.BlockSpec((tk, tn), lambda i, j, k: (k, j))],
            out_specs=pl.BlockSpec((tm, tn), lambda i, j, k: (i, j)),
            scratch_shapes=[pltpu.VMEM((tm, tn), jnp.float32)],
        ),
        compiler_params=pltpu.CompilerParams(
            dimension_semantics=("parallel", "parallel", "arbitrary")),
        cost_estimate=pl.CostEstimate(
            flops=int(2 * M * K2 * N2),            # == 8*M*K*N complex flops
            transcendentals=0,
            bytes_accessed=int(
                jnp.dtype(x.dtype).itemsize * (M * K2 + K2 * N2) + 4 * M * N2)),
    )(x, w)


def _fused_weight(W, dtype=jnp.float32):
    """Complex (K, N) weight -> (2K, 2N) interleaved real block [[wr,wi],[-wi,wr]].

    With interleaved activations x_int[:, 2k]=re, x_int[:, 2k+1]=im this makes
    x_int @ W_int produce interleaved complex outputs in one real matmul.
    Computed once per operator variant and cached (weight-streaming bound op).
    """
    W = jnp.asarray(W, dtype=jnp.complex64)
    K, N = W.shape
    wr = jnp.real(W).astype(jnp.float32)
    wi = jnp.imag(W).astype(jnp.float32)
    top = jnp.stack([wr, wi], axis=-1)        # rows 2k
    bot = jnp.stack([-wi, wr], axis=-1)       # rows 2k+1
    fused = jnp.stack([top, bot], axis=1)     # (K, 2, N, 2)
    return fused.reshape(2 * K, 2 * N).astype(dtype)


# ----------------------------------------------------------------------------
# MatrixOperator family (JAX / Pallas realization of the reference classes).
# ----------------------------------------------------------------------------
class MatrixOperator:
    def __init__(self, input_shape, output_shape):
        self.input_shape = tuple(input_shape)
        self.output_shape = tuple(output_shape)

    def forward(self, x):
        raise NotImplementedError

    def forward_MatrixOperator(self):
        return self

    # TODO(synk): the reference computes a generic transpose via autograd of
    # forward(); concrete subclasses here implement transpose() explicitly.
    def transpose(self, y):
        raise NotImplementedError

    def conjugate(self, x):
        return jnp.conj(self.forward(jnp.conj(x)))

    def conjugate_transpose(self, y):
        return jnp.conj(self.transpose(jnp.conj(y)))

    def transpose_MatrixOperator(self):
        return TransposeMatrixOperator(self)

    def conjugate_MatrixOperator(self):
        return ConjugateMatrixOperator(self)

    def conjugate_transpose_MatrixOperator(self):
        return ConjugateTransposeMatrixOperator(self)

    # TODO(synk): pseudo_inverse (weighted-average / conjugate-gradient) is a
    # host-side iterative driver around forward/conjugate_transpose; omitted.

    def __mul__(self, x):
        return self.forward(x)


class TransposeMatrixOperator(MatrixOperator):
    def __init__(self, base):
        MatrixOperator.__init__(self, base.output_shape, base.input_shape)
        self.base_matrix_operator = base

    def forward(self, x):
        return self.base_matrix_operator.transpose(x)

    def conjugate(self, x):
        return self.base_matrix_operator.conjugate_transpose(x)

    def transpose(self, y):
        return self.base_matrix_operator.forward(y)

    def conjugate_transpose(self, y):
        return self.base_matrix_operator.conjugate(y)


class ConjugateMatrixOperator(MatrixOperator):
    def __init__(self, base):
        # NOTE: mirrors the reference implementation's (output, input) order.
        MatrixOperator.__init__(self, base.output_shape, base.input_shape)
        self.base_matrix_operator = base

    def forward(self, x):
        return self.base_matrix_operator.conjugate(x)

    def conjugate(self, x):
        return self.base_matrix_operator.forward(x)

    def transpose(self, y):
        return self.base_matrix_operator.conjugate_transpose(y)

    def conjugate_transpose(self, y):
        return self.base_matrix_operator.transpose(y)


class ConjugateTransposeMatrixOperator(MatrixOperator):
    def __init__(self, base):
        MatrixOperator.__init__(self, base.output_shape, base.input_shape)
        self.base_matrix_operator = base

    def forward(self, x):
        return self.base_matrix_operator.conjugate_transpose(x)

    def conjugate(self, x):
        return self.base_matrix_operator.transpose(x)

    def transpose(self, y):
        return self.base_matrix_operator.conjugate(y)

    def conjugate_transpose(self, y):
        return self.base_matrix_operator.forward(y)


class SquareMatrixOperator(MatrixOperator):
    def __init__(self, input_shape):
        MatrixOperator.__init__(self, input_shape, input_shape)


class HermitianMatrixOperator(SquareMatrixOperator):
    def conjugate_transpose(self, y):
        return self.forward(y)

    def conjugate(self, x):
        return self.transpose(x)


class RealMatrixOperator(MatrixOperator):
    def conjugate(self, x):
        return self.forward(x)

    def conjugate_MatrixOperator(self):
        return self

    def conjugate_transpose(self, y):
        return self.transpose(y)

    def conjugate_transpose_MatrixOperator(self):
        return TransposeMatrixOperator(self)


class SymmetricMatrixOperator(SquareMatrixOperator):
    def transpose(self, y):
        return self.forward(y)


class UnitaryMatrixOperator(MatrixOperator):
    def __init__(self, input_shape):
        MatrixOperator.__init__(self, input_shape, input_shape)

    def inverse_MatrixOperator(self):
        return self.conjugate_transpose_MatrixOperator()


class IdentityMatrixOperator(RealMatrixOperator, UnitaryMatrixOperator,
                             HermitianMatrixOperator, SymmetricMatrixOperator):
    """Identity operator: forward(x) == x, realized as a Pallas copy kernel."""

    def __init__(self, input_shape):
        SquareMatrixOperator.__init__(self, input_shape)

    def forward(self, x):
        shape = x.shape
        feat_nd = len(self.input_shape)
        lead = math.prod(shape[:-feat_nd]) if feat_nd < len(shape) else 1
        feat = math.prod(shape[-feat_nd:])
        is_complex = jnp.issubdtype(x.dtype, jnp.complexfloating)
        if is_complex:
            # One interleaved f32 plane (matches complex64 storage layout; the
            # output stays lane-dense and the re/im recombine is a single pass).
            # TODO(synk): lax.bitcast_convert_type rejects complex dtypes, so a
            # zero-copy c64<->f32x2 view is not available; this interleave is
            # the cheapest supported form.
            xf = jnp.stack([jnp.real(x), jnp.imag(x)], axis=-1).astype(jnp.float32)
            slab = xf.reshape(lead, feat * 2)
        else:
            slab = x.reshape(lead, feat)
        # Mem-bound copy: big lane-dense tiles (>=512 rows hits ~85% of HBM
        # roofline); double-buffered in+out stays well under the 32 MiB scoped
        # VMEM default even at 512 x 2048 f32 (4 MiB/tile -> 16 MiB total).
        su = _sublane_unit(slab.dtype)
        tm = _pick_tile(slab.shape[0], 512, su)
        tn = _pick_tile(slab.shape[1], 2048, 128)
        y_slab = _identity_copy(slab, tm=tm, tn=tn)
        if is_complex:
            y3 = y_slab.reshape(lead, feat, 2)
            y = jax.lax.complex(y3[..., 0], y3[..., 1]).astype(x.dtype)
            return y.reshape(shape)
        return y_slab.reshape(shape).astype(x.dtype)


class DenseMatrixOperator(MatrixOperator):
    """Dense realization: y = A @ vec(x), A complex of shape (n_out, n_in).

    All four weight variants (A^T, A, conj(A^T), conj(A)) are precomputed once
    as fused interleaved f32 (or bf16) blocks, so every call is a single
    Pallas MXU matmul with no per-call transpose/conj/split of the weights.
    """

    def __init__(self, A, input_shape, output_shape, use_bf16=False):
        MatrixOperator.__init__(self, input_shape, output_shape)
        n_in = math.prod(input_shape)
        n_out = math.prod(output_shape)
        A = jnp.asarray(A, dtype=jnp.complex64)
        assert A.shape == (n_out, n_in)
        # bf16 halves weight bytes streamed from HBM on v6e/v7x (f32 accum kept);
        # default f32 preserves full precision (and matches v5e's f32 path).
        self._wdtype = jnp.bfloat16 if use_bf16 else jnp.float32
        At = jnp.transpose(A)
        self._W = {
            "forward":             _fused_weight(At, self._wdtype),
            "transpose":           _fused_weight(A, self._wdtype),
            "conjugate":           _fused_weight(jnp.conj(At), self._wdtype),
            "conjugate_transpose": _fused_weight(jnp.conj(A), self._wdtype),
        }

    def _apply(self, x, which, out_feat_shape):
        W = self._W[which]
        K2, N2 = W.shape
        K = K2 // 2
        B, C = x.shape[0], x.shape[1]
        M = B * C
        x2 = jnp.reshape(x, (M, K)).astype(jnp.complex64)
        x_int = jnp.stack([jnp.real(x2), jnp.imag(x2)], axis=-1)
        x_int = x_int.reshape(M, K2).astype(self._wdtype)
        Mp = -(-M // 8) * 8                      # sublane-align rows
        if Mp != M:
            x_int = jnp.pad(x_int, ((0, Mp - M), (0, 0)))
        # Lane-dense output tile is the biggest lever -> favor a wide tn;
        # worst case VMEM: x 256x512 + w 512x1024 + y 256x1024 (x2 buffers each)
        # + 1 MiB acc  ~= 8 MiB, well inside the 32 MiB scoped default.
        tm = _pick_tile(Mp, 256, 8)
        tk = _pick_tile(K2, 512, 128)
        tn = _pick_tile(N2, 1024, 128)
        y_int = _fused_matmul(x_int, W, tm=tm, tn=tn, tk=tk)
        y3 = y_int[:M].reshape(M, N2 // 2, 2)
        y = jax.lax.complex(y3[..., 0], y3[..., 1]).astype(jnp.complex64)
        return jnp.reshape(y, (B, C) + tuple(out_feat_shape))

    def forward(self, x):
        return self._apply(x, "forward", self.output_shape)

    def transpose(self, y):
        return self._apply(y, "transpose", self.input_shape)

    def conjugate(self, x):
        return self._apply(x, "conjugate", self.output_shape)

    def conjugate_transpose(self, y):
        return self._apply(y, "conjugate_transpose", self.input_shape)


if __name__ == "__main__":
    key = jax.random.PRNGKey(0)
    k_xr, k_xi, k_ar, k_ai = jax.random.split(key, 4)

    batch, channels = 2, 4
    input_shape = (16, 16)                       # n_in = 256 (lane-aligned)
    x = (jax.random.normal(k_xr, (batch, channels) + input_shape, dtype=jnp.float32)
         + 1j * jax.random.normal(k_xi, (batch, channels) + input_shape, dtype=jnp.float32)
         ).astype(jnp.complex64)

    # --- IdentityMatrixOperator (the spec module): forward is a Pallas copy ---
    ident = IdentityMatrixOperator(input_shape)
    y = jax.block_until_ready(ident.forward(x))
    assert y.shape == x.shape and y.dtype == jnp.complex64
    assert jnp.allclose(y, x)

    # Real-dtype path through the same copy kernel.
    xr = jax.random.normal(k_xr, (batch, channels) + input_shape, dtype=jnp.float32)
    yr = jax.block_until_ready(ident.forward(xr))
    assert jnp.allclose(yr, xr)

    # Identity algebra: transpose / conjugate_transpose / derived wrappers are identity too.
    yt = jax.block_until_ready(ident.transpose_MatrixOperator().forward(x))
    yh = jax.block_until_ready(ident.conjugate_transpose_MatrixOperator().forward(x))
    assert jnp.allclose(yt, x) and jnp.allclose(yh, x)
    assert jnp.allclose(ident * x, x)

    # --- Dense realization exercising the fused complex-matmul Pallas kernel ---
    out_shape_dense = (8, 16)                    # n_out = 128
    n_in = math.prod(input_shape)
    n_out = math.prod(out_shape_dense)
    A = (jax.random.normal(k_ar, (n_out, n_in), dtype=jnp.float32)
         + 1j * jax.random.normal(k_ai, (n_out, n_in), dtype=jnp.float32)
         ).astype(jnp.complex64)
    dense = DenseMatrixOperator(A, input_shape, out_shape_dense)

    yd = jax.block_until_ready(dense.forward(x))
    x_flat = x.reshape(batch * channels, n_in)
    yd_ref = (x_flat @ A.T).reshape(batch, channels, *out_shape_dense)
    assert yd.shape == (batch, channels) + out_shape_dense and yd.dtype == jnp.complex64
    assert jnp.allclose(yd, yd_ref, rtol=1e-4, atol=1e-3)

    yct = jax.block_until_ready(dense.conjugate_transpose(yd))
    yct_ref = (yd.reshape(batch * channels, n_out) @ jnp.conj(A)).reshape(
        batch, channels, *input_shape)
    assert jnp.allclose(yct, yct_ref, rtol=1e-4, atol=1e-3)

    print("KERNEL_OK")
</pallas_src>

<mosaic_0001>
module attributes {stable_mosaic.version = 11 : i64} {
  func.func @_copy_kernel(%arg0: i32, %arg1: i32, %arg2: memref<8x512xf32, #tpu.memory_space<vmem>>, %arg3: memref<8x512xf32, #tpu.memory_space<vmem>>) attributes {dimension_semantics = [#tpu.dimension_semantics<parallel>, #tpu.dimension_semantics<parallel>], iteration_bounds = array<i64: 1, 1>, scalar_prefetch = 0 : i64, scratch_operands = 0 : i64, tpu.core_type = #tpu.core_type<tc>, window_params = [{transform_indices = @transform_0, window_bounds = array<i64: 8, 512>}, {transform_indices = @transform_1, window_bounds = array<i64: 8, 512>}]} {
    %c0 = arith.constant 0 : index
    %c0_0 = arith.constant 0 : index
    %0 = vector.load %arg2[%c0, %c0_0] : memref<8x512xf32, #tpu.memory_space<vmem>>, vector<8x512xf32>
    %c0_1 = arith.constant 0 : index
    %c0_2 = arith.constant 0 : index
    %1 = vector.load %arg3[%c0_1, %c0_2] : memref<8x512xf32, #tpu.memory_space<vmem>>, vector<8x512xf32>
    tpu.vector_store %arg3[%c0_1, %c0_2], %0 {strides = array<i32>} : memref<8x512xf32, #tpu.memory_space<vmem>>, vector<8x512xf32>,
    return
  }
  func.func @transform_0(%arg0: i32, %arg1: i32) -> (i32, i32) {
    %c0_i32 = arith.constant 0 : i32
    return %arg0, %arg1 : i32, i32
  }
  func.func @transform_1(%arg0: i32, %arg1: i32) -> (i32, i32) {
    %c0_i32 = arith.constant 0 : i32
    return %arg0, %arg1 : i32, i32
  }
}

</mosaic_0001>

<llo_original>
// kernel: _identity_copy.1
$region0: #{_identity_copy.1}
  #allocation0 [shape = 'u32[]', space=smem, size = 0x4, offset = 0x4, fixed_abs, tag = 'smem constant byte address 0x4 - core index']
  #allocation1 [shape = 'u32[72,128]{1,0:T(1,128)}', space=vmem, size = 0x9000, scoped, tag = 'internal scratch']
  %s0 = inlined_call_operand.hbm [shape: f32[8,512], index: 0, kind: input, shape index: {}]
  %s1 = inlined_call_operand.hbm [shape: f32[8,512], index: 1, kind: output, shape index: {}]
  %s2 = sld [smem:[#allocation0]]
  $region18: #{_identity_copy.1} parent=0
    _
  %s4 = ssub.s32 1, %s2
  %s5 = scalar_select 0, %s4, %s2
  $region1: #{_identity_copy.1} parent=0
    #allocation2 [shape = 'u8[16384]{0}', space=vmem, size = 0x4000, scoped, tag = 'input window, operand 0, single buffered']
    #allocation3 [shape = 's32[1]{0}', space=sflag, size = 0x4, scoped, tag = 'scoped memory for _identity_copy.1']
    #allocation4 [shape = 's32[1]{0}', space=sflag, size = 0x4, scoped, tag = 'scoped memory for _identity_copy.1']
    #allocation5 [shape = 'u8[16384]{0}', space=vmem, size = 0x4000, scoped, tag = 'output window, operand 0, single buffered']
    %6 = vsyncpa [#allocation3], 0
    %7 = vsyncpa [#allocation4], 0
    // Predicated region
    $region2: #{_identity_copy.1} parent=1 // pred_check
      _
    $region3: #{_identity_copy.1} parent=1 // pred_check_branch
      %9 = sbr.rel (0) target = $region5
    $region4: #{_identity_copy.1} parent=1 // pred_region
      %11 = vsyncadd [#allocation3], 0
      %s13 = sshll.u32 %s0, 4
      %s14 = int_to_ptr.hbm [resolvable:$true] %s13
      %s15 = sshll.u32 [#allocation2], 4
      %s16 = int_to_ptr.vmem [resolvable:$true] %s15
      %18 = dma.hbm_to_vmem [thread:$0]  %s14, 512, %s16, [#allocation3]
    $region5: #{_identity_copy.1} parent=1 // pred_fallthru
      _
    // Predicated region
    $region6: #{_identity_copy.1} parent=1 // pred_check
      _
    $region7: #{_identity_copy.1} parent=1 // pred_check_branch
      %20 = sbr.rel (0) target = $region9
    $region8: #{_identity_copy.1} parent=1 // pred_region
      %22 = dma.done [#allocation3], 512
    $region9: #{_identity_copy.1} parent=1 // pred_fallthru
      _
    %v23 = vld [vmem:[#allocation2] sm:$0xff]
    %v24 = vld [vmem:[#allocation2 + $0x8] sm:$0xff]
    %v25 = vld [vmem:[#allocation2 + $0x10] sm:$0xff]
    %v26 = vld [vmem:[#allocation2 + $0x18] sm:$0xff]
    %27 = vst [vmem:[#allocation5] sm:$0xff] %v23
    %28 = vst [vmem:[#allocation5 + $0x8] sm:$0xff] %v24
    %29 = vst [vmem:[#allocation5 + $0x10] sm:$0xff] %v25
    %30 = vst [vmem:[#allocation5 + $0x18] sm:$0xff] %v26
    // Predicated region
    $region10: #{_identity_copy.1} parent=1 // pred_check
      _
    $region11: #{_identity_copy.1} parent=1 // pred_check_branch
      %32 = sbr.rel (0) target = $region13
    $region12: #{_identity_copy.1} parent=1 // pred_region
      %34 = vsyncadd [#allocation4], 0
      %s36 = sshll.u32 [#allocation5], 4
      %s37 = int_to_ptr.vmem [resolvable:$true] %s36
      %s38 = sshll.u32 %s1, 4
      %s39 = int_to_ptr.hbm [resolvable:$true] %s38
      %41 = dma.vmem_to_hbm [thread:$0]  %s37, 512, %s39, [#allocation4]
    $region13: #{_identity_copy.1} parent=1 // pred_fallthru
      _
    // Predicated region
    $region14: #{_identity_copy.1} parent=1 // pred_check
      _
    $region15: #{_identity_copy.1} parent=1 // pred_check_branch
      %43 = sbr.rel (0) target = $region17
    $region16: #{_identity_copy.1} parent=1 // pred_region
      %45 = dma.done [#allocation4], 512
    $region17: #{_identity_copy.1} parent=1 // pred_fallthru
      _
    %46 = vsyncpa [#allocation3], 1
    %47 = vsyncpa [#allocation4], 1

</llo_original>
